<compile_context>
chip_gen: v7x
topology: tpu7x:2x2x1
jax: 0.10.0
libtpu: 0.0.40
codegen_flags: <defaults>
</compile_context>

<pallas_src>
import functools

import jax
import jax.numpy as jnp
from jax.experimental import pallas as pl
from jax.experimental.pallas import tpu as pltpu


# ---------------------------------------------------------------------------
# Kernel 1: QKV projection  (B*N, D_in) @ (D_in, 3*H*dh) -> (B*N, 3*H*dh) bf16
# ---------------------------------------------------------------------------
def _qkv_kernel(x_ref, w_ref, o_ref):
    x = x_ref[...].astype(jnp.bfloat16)           # (tm, Din)
    w = w_ref[...]                                # (Din, tn) already bf16
    o_ref[...] = jnp.dot(
        x, w, preferred_element_type=jnp.float32
    ).astype(o_ref.dtype)


def _pick_tile(dim, candidates):
    for c in candidates:
        if dim % c == 0:
            return c
    return dim  # full extent is always legal


def qkv_projection(x2d, w_t_bf16):
    """x2d: (M, Din) f32, w_t_bf16: (Din, 3*H*dh) bf16 -> (M, 3*H*dh) bf16."""
    M, Din = x2d.shape
    out_dim = w_t_bf16.shape[1]
    tm = _pick_tile(M, (512, 256, 128, 64, 32, 16, 8))
    tn = _pick_tile(out_dim, (512, 384, 256, 128))
    return pl.pallas_call(
        _qkv_kernel,
        out_shape=jax.ShapeDtypeStruct((M, out_dim), jnp.bfloat16),
        grid_spec=pltpu.PrefetchScalarGridSpec(
            num_scalar_prefetch=0,
            grid=(M // tm, out_dim // tn),
            in_specs=[
                pl.BlockSpec((tm, Din), lambda i, j: (i, 0)),
                pl.BlockSpec((Din, tn), lambda i, j: (0, j)),
            ],
            out_specs=pl.BlockSpec((tm, tn), lambda i, j: (i, j)),
        ),
        compiler_params=pltpu.CompilerParams(
            dimension_semantics=("parallel", "parallel")
        ),
    )(x2d, w_t_bf16)


# ---------------------------------------------------------------------------
# Kernel 2: scaled-dot-product attention, reading q/k/v from flat qkv layout.
#   qkv: (B, N, 3*H*dh) bf16 (scale pre-baked into q)  ->  out: (B, N, H*dh) f32
# Each grid step handles one batch and `hpb` heads (hpb*dh >= 128 lanes).
# ---------------------------------------------------------------------------
def _attn_kernel(q_ref, k_ref, v_ref, o_ref, *, dh, hpb):
    outs = []
    for hh in range(hpb):                          # static unroll over heads in block
        sl = slice(hh * dh, (hh + 1) * dh)
        q = q_ref[0, :, sl]                        # (N, dh) bf16, already scaled
        k = k_ref[0, :, sl]                        # (N, dh) bf16
        v = v_ref[0, :, sl]                        # (N, dh) bf16

        # energy[i, j] = sum_d q[i, d] * k[j, d]   (no explicit k transpose)
        energy = jax.lax.dot_general(
            q, k,
            dimension_numbers=(((1,), (1,)), ((), ())),
            preferred_element_type=jnp.float32,
        )                                          # (N, N) f32

        m = jnp.max(energy, axis=-1, keepdims=True)
        p = jnp.exp(energy - m)
        denom = jnp.sum(p, axis=-1, keepdims=True)
        attn = p * pl.reciprocal(denom, approx=True)   # EUP reciprocal, f32

        out = jnp.dot(
            attn.astype(jnp.bfloat16), v, preferred_element_type=jnp.float32
        )                                          # (N, dh) f32
        outs.append(out)

    o_ref[0] = jnp.concatenate(outs, axis=-1).astype(o_ref.dtype)


def _heads_per_block(heads, dh):
    # smallest head count whose combined lane width is a multiple of 128
    for hpb in range(1, heads + 1):
        if heads % hpb == 0 and (hpb * dh) % 128 == 0:
            return hpb
    return heads  # fallback; defaults (8, 64) never reach here


def sdpa(qkv, heads, dh):
    """qkv: (B, N, 3*H*dh) bf16 -> (B, N, H*dh) f32, scale already in q."""
    B, N, _ = qkv.shape
    hidden = heads * dh
    hpb = _heads_per_block(heads, dh)
    nhg = heads // hpb                 # number of head-groups
    bw = hpb * dh                      # lane width of each block (>=128)
    blk = (1, N, bw)

    kern = functools.partial(_attn_kernel, dh=dh, hpb=hpb)
    return pl.pallas_call(
        kern,
        out_shape=jax.ShapeDtypeStruct((B, N, hidden), jnp.float32),
        grid_spec=pltpu.PrefetchScalarGridSpec(
            num_scalar_prefetch=0,
            grid=(B, nhg),
            in_specs=[
                pl.BlockSpec(blk, lambda b, hg: (b, 0, hg)),              # q third
                pl.BlockSpec(blk, lambda b, hg: (b, 0, nhg + hg)),        # k third
                pl.BlockSpec(blk, lambda b, hg: (b, 0, 2 * nhg + hg)),    # v third
            ],
            out_specs=pl.BlockSpec(blk, lambda b, hg: (b, 0, hg)),
        ),
        compiler_params=pltpu.CompilerParams(
            dimension_semantics=("parallel", "parallel")
        ),
    )(qkv, qkv, qkv)


# ---------------------------------------------------------------------------
# Module wrapper
# ---------------------------------------------------------------------------
class AttentionPallas:
    def __init__(self, input_dim: int, heads: int = 8, dim_head: int = 64,
                 dropout: float = 0.0, *, key=None):
        self.heads = heads
        self.dim_head = dim_head
        self.scale = dim_head ** (-0.5)
        self.hidden = heads * dim_head
        if key is None:
            key = jax.random.PRNGKey(0)
        # nn.Linear(input_dim, 3*hidden, bias=False): weight (3*hidden, input_dim).
        bound = 1.0 / (input_dim ** 0.5)
        w = jax.random.uniform(
            key, (3 * self.hidden, input_dim), jnp.float32,
            minval=-bound, maxval=bound,
        )
        self.w_qkv_t = jnp.transpose(w)  # (input_dim, 3*hidden) f32 (reference copy)
        # Bake dh^-0.5 into the q columns; pre-cast to bf16 for the MXU.
        w_scaled = self.w_qkv_t.at[:, : self.hidden].multiply(self.scale)
        self.w_qkv_t_bf16 = w_scaled.astype(jnp.bfloat16)
        # NOTE: self.proj (Linear + Dropout) is never used in the reference
        # forward(), so it is intentionally omitted.

    def __call__(self, x):
        # x: (B, N, D_in) f32
        B, N, Din = x.shape
        x2d = x.reshape(B * N, Din)
        qkv = qkv_projection(x2d, self.w_qkv_t_bf16)      # (B*N, 3*hidden) bf16
        qkv = qkv.reshape(B, N, 3 * self.hidden)
        out = sdpa(qkv, self.heads, self.dim_head)        # (B, N, hidden) f32
        return out


# ---------------------------------------------------------------------------
# Pure-JAX reference for verification (f32 throughout, explicit scale)
# ---------------------------------------------------------------------------
def reference_forward(x, w_qkv_t, heads, dim_head):
    B, N, _ = x.shape
    scale = dim_head ** (-0.5)
    qkv = jnp.einsum("bnd,de->bne", x, w_qkv_t)
    q, k, v = jnp.split(qkv, 3, axis=-1)

    def to_heads(t):
        return jnp.transpose(t.reshape(B, N, heads, dim_head), (0, 2, 1, 3))

    q, k, v = map(to_heads, (q, k, v))
    energy = jnp.einsum("bhnd,bhmd->bhnm", q, k) * scale
    attn = jax.nn.softmax(energy, axis=-1)
    out = jnp.einsum("bhnm,bhmd->bhnd", attn, v)
    return jnp.transpose(out, (0, 2, 1, 3)).reshape(B, N, heads * dim_head)


if __name__ == "__main__":
    key = jax.random.PRNGKey(0)
    k_x, k_w = jax.random.split(key)

    B, N, D_in = 2, 8, 32
    heads, dim_head = 8, 64

    x = jax.random.normal(k_x, (B, N, D_in), dtype=jnp.float32)

    module = AttentionPallas(D_in, heads=heads, dim_head=dim_head, key=k_w)
    out = jax.block_until_ready(module(x))

    ref = reference_forward(x, module.w_qkv_t, heads, dim_head)
    assert out.shape == (B, N, heads * dim_head), out.shape
    # bf16 MXU operands + approx reciprocal => slightly looser tolerance.
    err = float(jnp.max(jnp.abs(out - ref)))
    assert jnp.allclose(out, ref, atol=5e-2, rtol=5e-2), f"mismatch vs reference, max_abs_err={err}"

    print("KERNEL_OK")
</pallas_src>

<mosaic_0001>
module attributes {stable_mosaic.version = 11 : i64} {
  func.func @_qkv_kernel(%arg0: i32, %arg1: i32, %arg2: memref<16x32xf32, #tpu.memory_space<vmem>>, %arg3: memref<32x512xbf16, #tpu.memory_space<vmem>>, %arg4: memref<16x512xbf16, #tpu.memory_space<vmem>>) attributes {dimension_semantics = [#tpu.dimension_semantics<parallel>, #tpu.dimension_semantics<parallel>], iteration_bounds = array<i64: 1, 3>, scalar_prefetch = 0 : i64, scratch_operands = 0 : i64, tpu.core_type = #tpu.core_type<tc>, window_params = [{transform_indices = @transform_0, window_bounds = array<i64: 16, 32>}, {transform_indices = @transform_1, window_bounds = array<i64: 32, 512>}, {transform_indices = @transform_2, window_bounds = array<i64: 16, 512>}]} {
    %c0 = arith.constant 0 : index
    %c0_0 = arith.constant 0 : index
    %0 = vector.load %arg2[%c0, %c0_0] : memref<16x32xf32, #tpu.memory_space<vmem>>, vector<16x32xf32>
    %1 = arith.truncf %0 : vector<16x32xf32> to vector<16x32xbf16>
    %c0_1 = arith.constant 0 : index
    %c0_2 = arith.constant 0 : index
    %2 = vector.load %arg3[%c0_1, %c0_2] : memref<32x512xbf16, #tpu.memory_space<vmem>>, vector<32x512xbf16>
    %cst = arith.constant dense<0.000000e+00> : vector<16x512xf32>
    %3 = tpu.matmul %1, %2, %cst {dimension_numbers = #tpu.dot_dimension_numbers<[1], [0], [0], [1], [0, 0, 1, 1], [], []>} : vector<16x32xbf16>, vector<32x512xbf16>, vector<16x512xf32> -> vector<16x512xf32>
    %4 = arith.truncf %3 : vector<16x512xf32> to vector<16x512xbf16>
    %c0_3 = arith.constant 0 : index
    %c0_4 = arith.constant 0 : index
    %5 = vector.load %arg4[%c0_3, %c0_4] : memref<16x512xbf16, #tpu.memory_space<vmem>>, vector<16x512xbf16>
    tpu.vector_store %arg4[%c0_3, %c0_4], %4 {strides = array<i32>} : memref<16x512xbf16, #tpu.memory_space<vmem>>, vector<16x512xbf16>,
    return
  }
  func.func @transform_0(%arg0: i32, %arg1: i32) -> (i32, i32) {
    %c0_i32 = arith.constant 0 : i32
    %c0_i32_0 = arith.constant 0 : i32
    return %arg0, %c0_i32 : i32, i32
  }
  func.func @transform_1(%arg0: i32, %arg1: i32) -> (i32, i32) {
    %c0_i32 = arith.constant 0 : i32
    %c0_i32_0 = arith.constant 0 : i32
    return %c0_i32, %arg1 : i32, i32
  }
  func.func @transform_2(%arg0: i32, %arg1: i32) -> (i32, i32) {
    %c0_i32 = arith.constant 0 : i32
    return %arg0, %arg1 : i32, i32
  }
}

</mosaic_0001>

<llo_original>
// kernel: tpu_custom_call.1
$region0: #{tpu_custom_call.1}
  #allocation0 [shape = 'u32[]', space=smem, size = 0x4, offset = 0x4, fixed_abs, tag = 'smem constant byte address 0x4 - core index']
  #allocation1 [shape = 'u32[144,128]{1,0:T(1,128)}', space=vmem, size = 0x12000, scoped, tag = 'internal scratch']
  %s0 = inlined_call_operand.hbm [shape: f32[16,32], index: 0, kind: input, shape index: {}]
  %s1 = inlined_call_operand.hbm [shape: bf16[32,1536], index: 1, kind: input, shape index: {}]
  %s2 = inlined_call_operand.hbm [shape: bf16[16,1536], index: 2, kind: output, shape index: {}]
  %s3 = sld [smem:[#allocation0]]
  $region49: #{tpu_custom_call.1} parent=0
    _
  %s5 = ssub.s32 1, %s3
  %s6 = scalar_select 0, %s5, %s3
  $region1: #{tpu_custom_call.1} parent=0
    #allocation2 [shape = 'u8[8192]{0}', space=vmem, size = 0x2000, scoped, tag = 'input window, operand 0, single buffered']
    #allocation3 [shape = 's32[2]{0}', space=sflag, size = 0x8, scoped, tag = 'scoped memory for tpu_custom_call.1']
    #allocation4 [shape = 's32[2]{0}', space=sflag, size = 0x8, scoped, tag = 'scoped memory for tpu_custom_call.1']
    #allocation5 [shape = 'u8[65536]{0}', space=vmem, size = 0x10000, scoped, tag = 'input window, operand 1']
    #allocation6 [shape = 's32[2]{0}', space=sflag, size = 0x8, scoped, tag = 'scoped memory for tpu_custom_call.1']
    #allocation7 [shape = 'u8[32768]{0}', space=vmem, size = 0x8000, scoped, tag = 'output window, operand 0']
    %7 = vsyncpa [#allocation3], 0
    %8 = vsyncpa [#allocation6], 0
    %s9 = scalar_lea.sflag [#allocation6], 1
    %10 = vsyncpa %s9, 0
    %11 = vsyncpa [#allocation4], 0
    %s12 = scalar_lea.sflag [#allocation4], 1
    %13 = vsyncpa %s12, 0
    loop: start=0, step=1, limit=5
    $region2: #{tpu_custom_call.1} parent=1 // loop_pre_header
      _
    $region3: #{tpu_custom_call.1} parent=1 // loop_header
      %s15 = sphi 0, %s19
      %p16 = scmp.ge.s32.totalorder %s15, 5
      %s22 = sphi 0, %s34
      %s23 = sphi 0, %s30
      %s24 = sphi 0, %s22
      %s25 = sphi 0, %s23
      %s26 = sphi 0, %s24
      %s27 = sphi 0, %s25
      %s37 = sphi 0, %s39
      %s40 = sphi 0, %s37
      %s41 = sphi 0, %s40
      %s57 = sphi 0, %s41
      %s63 = sphi 0, %s65
      %s66 = sphi 0, %s63
      %s67 = sphi 0, %s66
      %s83 = sphi 0, %s67
      %s91 = sphi 0, %s93
      %s94 = sphi 0, %s91
      %s95 = sphi 0, %s94
      %s111 = sphi 0, %s95
    $region4: #{tpu_custom_call.1} parent=1 // loop_header_branch
      %18 = sbr.rel (%p16) target = $region8
    $region5: #{tpu_custom_call.1} parent=1 // loop_body
      %s20 = ssub.s32 %s15, 1
      %s21 = ssub.s32 %s15, 2
      %s28 = sadd.s32 1, %s23
      %p29 = scmp.ge.s32.totalorder %s28, 3
      %s30 = scalar_select %p29, 0, %s28
      %s31 = sadd.s32 1, %s22
      %s32 = scalar_select %p29, %s31, %s22
      %p33 = scmp.ge.s32.totalorder %s32, 1
      %s34 = scalar_select %p33, 0, %s32
      %s35 = ssub.s32 %s22, %s34
      %p36 = scmp.eq.s32.totalorder %s35, 0
      %s38 = sadd.s32 %s37, 1
      %s39 = scalar_select %p36, %s37, %s38
      %p42 = pneg %p36
      %p43 = scmp.eq.s32.totalorder %s15, 2
      %p44 = por %p42, %p43
      %p45 = scmp.ne.s32.totalorder %s37, %s40
      %p46 = scmp.eq.s32.totalorder %s15, 0
      %p47 = por %p45, %p46
      %p48 = scmp.ne.s32.totalorder %s37, %s40
      %p49 = scmp.eq.s32.totalorder %s20, 2
      %p50 = por %p48, %p49
      %p51 = scmp.ne.s32.totalorder %s40, %s41
      %p52 = scmp.eq.s32.totalorder %s20, 0
      %p53 = por %p51, %p52
      %p54 = scmp.ne.s32.totalorder %s40, %s41
      %p55 = scmp.eq.s32.totalorder %s21, 2
      %p56 = por %p54, %p55
      %p58 = scmp.ne.s32.totalorder %s41, %s57
      %p59 = scmp.eq.s32.totalorder %s21, 0
      %p60 = por %p58, %p59
      %s61 = ssub.s32 %s23, %s30
      %p62 = scmp.eq.s32.totalorder %s61, 0
      %s64 = sadd.s32 %s63, 1
      %s65 = scalar_select %p62, %s63, %s64
      %p68 = pneg %p62
      %p69 = scmp.eq.s32.totalorder %s15, 2
      %p70 = por %p68, %p69
      %p71 = scmp.ne.s32.totalorder %s63, %s66
      %p72 = scmp.eq.s32.totalorder %s15, 0
      %p73 = por %p71, %p72
      %p74 = scmp.ne.s32.totalorder %s63, %s66
      %p75 = scmp.eq.s32.totalorder %s20, 2
      %p76 = por %p74, %p75
      %p77 = scmp.ne.s32.totalorder %s66, %s67
      %p78 = scmp.eq.s32.totalorder %s20, 0
      %p79 = por %p77, %p78
      %p80 = scmp.ne.s32.totalorder %s66, %s67
      %p81 = scmp.eq.s32.totalorder %s21, 2
      %p82 = por %p80, %p81
      %p84 = scmp.ne.s32.totalorder %s67, %s83
      %p85 = scmp.eq.s32.totalorder %s21, 0
      %p86 = por %p84, %p85
      %s87 = ssub.s32 %s22, %s34
      %s88 = ssub.s32 %s23, %s30
      %s89 = sor.u32 %s87, %s88
      %p90 = scmp.eq.s32.totalorder %s89, 0
      %s92 = sadd.s32 %s91, 1
      %s93 = scalar_select %p90, %s91, %s92
      %p96 = pneg %p90
      %p97 = scmp.eq.s32.totalorder %s15, 2
      %p98 = por %p96, %p97
      %p99 = scmp.ne.s32.totalorder %s91, %s94
      %p100 = scmp.eq.s32.totalorder %s15, 0
      %p101 = por %p99, %p100
      %p102 = scmp.ne.s32.totalorder %s91, %s94
      %p103 = scmp.eq.s32.totalorder %s20, 2
      %p104 = por %p102, %p103
      %p105 = scmp.ne.s32.totalorder %s94, %s95
      %p106 = scmp.eq.s32.totalorder %s20, 0
      %p107 = por %p105, %p106
      %p108 = scmp.ne.s32.totalorder %s94, %s95
      %p109 = scmp.eq.s32.totalorder %s21, 2
      %p110 = por %p108, %p109
      %p112 = scmp.ne.s32.totalorder %s95, %s111
      %p113 = scmp.eq.s32.totalorder %s21, 0
      %p114 = por %p112, %p113
      %p115 = scmp.le.s32.totalorder 1, %s15
      %p116 = scmp.lt.s32.totalorder %s15, 4
      %p117 = pnand %p115, %p116
      %p118 = pneg %p117
      // Predicated region
      $region9: #{tpu_custom_call.1} parent=5 // pred_check
        _
      $region10: #{tpu_custom_call.1} parent=5 // pred_check_branch
        %120 = sbr.rel (%p117) target = $region12
      $region11: #{tpu_custom_call.1} parent=5 // pred_region
        %s121 = ssub.s32 %s15, 1
        // Predicated region
        $region13: #{tpu_custom_call.1} parent=11 // pred_check
          %p122 = pneg %p53
        $region14: #{tpu_custom_call.1} parent=11 // pred_check_branch
          %124 = sbr.rel (%p122) target = $region16
        $region15: #{tpu_custom_call.1} parent=11 // pred_region
          %s125 = smul.u32 2, %s24
          %s127 = ssub.s32 256, 256
          %128 = vsyncadd [#allocation3], %s127
          %s129 = smul.addr %s125, 128
          %s130 = scalar_lea.hbm %s0, %s129
          %s131 = sshll.u32 [#allocation2], 4
          %s132 = int_to_ptr.vmem [resolvable:$true] %s131
          %137 = dma.hbm_to_vmem [thread:$0]  %s130, 256, %s132, [#allocation3], 128, 128, 8
        $region16: #{tpu_custom_call.1} parent=11 // pred_fallthru
          _
      $region12: #{tpu_custom_call.1} parent=5 // pred_fallthru
        _
      %p138 = scmp.lt.s32.totalorder %s15, 3
      // Predicated region
      $region17: #{tpu_custom_call.1} parent=5 // pred_check
        %p139 = pneg %p138
      $region18: #{tpu_custom_call.1} parent=5 // pred_check_branch
        %141 = sbr.rel (%p139) target = $region20
      $region19: #{tpu_custom_call.1} parent=5 // pred_region
        // Predicated region
        $region21: #{tpu_custom_call.1} parent=19 // pred_check
          %p142 = pneg %p73
        $region22: #{tpu_custom_call.1} parent=19 // pred_check_branch
          %144 = sbr.rel (%p142) target = $region24
        $region23: #{tpu_custom_call.1} parent=19 // pred_region
          %s145 = sand.u32 %s63, 1
          %s146 = scalar_lea.sflag [#allocation6], %s145
          %s147 = sand.u32 %s63, 1
          %s148 = smul.addr %s147, 64
          %s149 = scalar_lea.vmem [#allocation5], %s148
          %s150 = smul.u32 4, %s23
          %s152 = ssub.s32 1024, 1024
          %153 = vsyncadd %s146, %s152
          %s154 = smul.addr %s150, 64
          %s155 = scalar_lea.hbm %s1, %s154
          %s156 = sshll.u32 %s149, 4
          %s157 = int_to_ptr.vmem [resolvable:$true] %s156
          %162 = dma.hbm_to_vmem [thread:$0]  %s155, 1024, %s157, %s146, 768, 256, 16
        $region24: #{tpu_custom_call.1} parent=19 // pred_fallthru
          _
      $region20: #{tpu_custom_call.1} parent=5 // pred_fallthru
        _
      %p163 = scmp.le.s32.totalorder 1, %s15
      %p164 = scmp.lt.s32.totalorder %s15, 4
      %p165 = pnand %p163, %p164
      %p166 = pneg %p165
      // Predicated region
      $region25: #{tpu_custom_call.1} parent=5 // pred_check
        _
      $region26: #{tpu_custom_call.1} parent=5 // pred_check_branch
        %168 = sbr.rel (%p165) target = $region28
      $region27: #{tpu_custom_call.1} parent=5 // pred_region
        %s169 = ssub.s32 %s15, 1
        // Predicated region
        $region29: #{tpu_custom_call.1} parent=27 // pred_check
          %p170 = pneg %p53
        $region30: #{tpu_custom_call.1} parent=27 // pred_check_branch
          %172 = sbr.rel (%p170) target = $region32
        $region31: #{tpu_custom_call.1} parent=27 // pred_region
          %173 = dma.done [#allocation3], 256
        $region32: #{tpu_custom_call.1} parent=27 // pred_fallthru
          _
        %s174 = sand.u32 %s66, 1
        %s175 = scalar_lea.sflag [#allocation6], %s174
        %s176 = sand.u32 %s66, 1
        %s177 = smul.addr %s176, 64
        %s178 = scalar_lea.vmem [#allocation5], %s177
        // Predicated region
        $region33: #{tpu_custom_call.1} parent=27 // pred_check
          %p179 = pneg %p79
        $region34: #{tpu_custom_call.1} parent=27 // pred_check_branch
          %181 = sbr.rel (%p179) target = $region36
        $region35: #{tpu_custom_call.1} parent=27 // pred_region
          %182 = dma.done %s175, 1024
        $region36: #{tpu_custom_call.1} parent=27 // pred_fallthru
          _
        %p183 = pneg %p53
        %p184 = pneg %p50
        %s185 = sand.u32 %s66, 1
        %s186 = scalar_lea.sflag [#allocation6], %s185
        %s187 = sand.u32 %s66, 1
        %s188 = smul.addr %s187, 64
        %s189 = scalar_lea.vmem [#allocation5], %s188
        %p190 = pneg %p79
        %p191 = pneg %p76
        %p192 = pneg %p107
        %p193 = pneg %p104
        %s194 = sand.u32 %s94, 1
        %s195 = scalar_lea.sflag [#allocation4], %s194
        %s196 = sand.u32 %s94, 1
        %s197 = smul.addr %s196, 32
        %s198 = scalar_lea.vmem [#allocation7], %s197
        %s199 = smul.u32 2, %s24
        %s200 = smul.u32 4, %s25
        %s201 = smul.u32 2, %s24
        %s202 = smul.u32 4, %s25
        %v204 = vld [vmem:[#allocation2] sm:$0xff]
        %v205 = vld [vmem:[#allocation2 + $0x8] sm:$0xff]
        %v206 = vpack.c.bf16 %v205, %v204
        %v207 = vld [vmem:[%s178] sm:$0xff]
        %v208 = vld [vmem:[%s178 + $0x8] sm:$0xff]
        %v209 = vld [vmem:[%s178 + $0x10] sm:$0xff]
        %v210 = vld [vmem:[%s178 + $0x18] sm:$0xff]
        %v211 = vld [vmem:[%s178 + $0x20] sm:$0xff]
        %v212 = vld [vmem:[%s178 + $0x28] sm:$0xff]
        %v213 = vld [vmem:[%s178 + $0x30] sm:$0xff]
        %v214 = vld [vmem:[%s178 + $0x38] sm:$0xff]
        %v223 = vunpack.c.l.b16 %v207
        %v224 = vunpack.c.h.b16 %v207
        %v225 = vunpack.c.l.b16 %v208
        %v226 = vunpack.c.h.b16 %v208
        %v227 = vunpack.c.l.b16 %v209
        %v228 = vunpack.c.h.b16 %v209
        %v229 = vunpack.c.l.b16 %v210
        %v230 = vunpack.c.h.b16 %v210
        %v231 = vunpack.c.l.b16 %v211
        %v232 = vunpack.c.h.b16 %v211
        %v233 = vunpack.c.l.b16 %v212
        %v234 = vunpack.c.h.b16 %v212
        %v235 = vunpack.c.l.b16 %v213
        %v236 = vunpack.c.h.b16 %v213
        %v237 = vunpack.c.l.b16 %v214
        %v238 = vunpack.c.h.b16 %v214
        %v239 = vpack.c.b16 %v227, %v223
        %v240 = vpack.c.b16 %v228, %v224
        %v241 = vpack.c.b16 %v229, %v225
        %v242 = vpack.c.b16 %v230, %v226
        %v243 = vpack.c.b16 %v235, %v231
        %v244 = vpack.c.b16 %v236, %v232
        %v245 = vpack.c.b16 %v237, %v233
        %v246 = vpack.c.b16 %v238, %v234
        %vm255 = vcmask 261120
        %v257 = vsel %vm255, %v206, 0
        %259 = vmatprep.subr.bf16.mxu0 %v240
        %260 = vmatpush1.bf16.msra.mxu0 %v239
        %261 = vmatprep.subr.bf16.mxu0 %v244
        %262 = vmatpush1.bf16.msra.mxu0 %v243
        %263 = vmatprep.subr.bf16.mxu0 0
        %264 = vmatpush1.bf16.msra.mxu0 0
        %265 = vmatprep.subr.bf16.mxu0 0
        %266 = vmatpush1.bf16.msra.mxu0 0
        %267 = vmatprep.subr.bf16.mxu0 0
        %268 = vmatpush1.bf16.msra.mxu0 0
        %269 = vmatprep.subr.bf16.mxu0 0
        %270 = vmatpush1.bf16.msra.mxu0 0
        %271 = vmatprep.subr.bf16.mxu0 0
        %272 = vmatpush1.bf16.msra.mxu0 0
        %273 = vmatprep.subr.bf16.mxu0 0
        %274 = vmatpush1.bf16.msra.mxu0 0
        %275 = vmatprep.subr.bf16.mxu0 0
        %276 = vmatpush1.bf16.msra.mxu0 0
        %277 = vmatprep.subr.bf16.mxu0 0
        %278 = vmatpush1.bf16.msra.mxu0 0
        %279 = vmatprep.subr.bf16.mxu0 0
        %280 = vmatpush1.bf16.msra.mxu0 0
        %281 = vmatprep.subr.bf16.mxu0 0
        %282 = vmatpush1.bf16.msra.mxu0 0
        %283 = vmatprep.subr.bf16.mxu0 0
        %284 = vmatpush1.bf16.msra.mxu0 0
        %285 = vmatprep.subr.bf16.mxu0 0
        %286 = vmatpush1.bf16.msra.mxu0 0
        %287 = vmatprep.subr.bf16.mxu0 0
        %288 = vmatpush1.bf16.msra.mxu0 0
        %289 = vmatprep.subr.bf16.mxu0 0
        %290 = vmatpush1.bf16.msra.mxu0 0
        %291 = vmatprep.mubr.bf16.mxu0 0
        %292 = vmatmul.mubr.bf16.gmra.mrb[0].mxu0 %v257
        %v293 = vpop.f32.mrb[0].mxu0
        %v294 = vadd.f32 0.0, %v293
        %v295 = vpop.f32.mrb[0].mxu0
        %v296 = vadd.f32 0.0, %v295
        %v297 = vpop.f32.mrb[0].mxu0
        %v298 = vadd.f32 0.0, %v297
        %v299 = vpop.f32.mrb[0].mxu0
        %v300 = vadd.f32 0.0, %v299
        %301 = vdwg.mxu0
        %302 = vmatprep.subr.bf16.mxu0 %v242
        %303 = vmatpush1.bf16.msra.mxu0 %v241
        %304 = vmatprep.subr.bf16.mxu0 %v246
        %305 = vmatpush1.bf16.msra.mxu0 %v245
        %306 = vmatprep.subr.bf16.mxu0 0
        %307 = vmatpush1.bf16.msra.mxu0 0
        %308 = vmatprep.subr.bf16.mxu0 0
        %309 = vmatpush1.bf16.msra.mxu0 0
        %310 = vmatprep.subr.bf16.mxu0 0
        %311 = vmatpush1.bf16.msra.mxu0 0
        %312 = vmatprep.subr.bf16.mxu0 0
        %313 = vmatpush1.bf16.msra.mxu0 0
        %314 = vmatprep.subr.bf16.mxu0 0
        %315 = vmatpush1.bf16.msra.mxu0 0
        %316 = vmatprep.subr.bf16.mxu0 0
        %317 = vmatpush1.bf16.msra.mxu0 0
        %318 = vmatprep.subr.bf16.mxu0 0
        %319 = vmatpush1.bf16.msra.mxu0 0
        %320 = vmatprep.subr.bf16.mxu0 0
        %321 = vmatpush1.bf16.msra.mxu0 0
        %322 = vmatprep.subr.bf16.mxu0 0
        %323 = vmatpush1.bf16.msra.mxu0 0
        %324 = vmatprep.subr.bf16.mxu0 0
        %325 = vmatpush1.bf16.msra.mxu0 0
        %326 = vmatprep.subr.bf16.mxu0 0
        %327 = vmatpush1.bf16.msra.mxu0 0
        %328 = vmatprep.subr.bf16.mxu0 0
        %329 = vmatpush1.bf16.msra.mxu0 0
        %330 = vmatprep.subr.bf16.mxu0 0
        %331 = vmatpush1.bf16.msra.mxu0 0
        %332 = vmatprep.subr.bf16.mxu0 0
        %333 = vmatpush1.bf16.msra.mxu0 0
        %334 = vmatprep.mubr.bf16.mxu0 0
        %335 = vmatmul.mubr.bf16.gmra.mrb[0].mxu0 %v257
        %v336 = vpop.f32.mrb[0].mxu0
        %v337 = vadd.f32 0.0, %v336
        %v338 = vpop.f32.mrb[0].mxu0
        %v339 = vadd.f32 0.0, %v338
        %v340 = vpop.f32.mrb[0].mxu0
        %v341 = vadd.f32 0.0, %v340
        %v342 = vpop.f32.mrb[0].mxu0
        %v343 = vadd.f32 0.0, %v342
        %344 = vdwg.mxu0
        %v345 = vpack.c.bf16 %v298, %v294
        %v346 = vpack.c.bf16 %v300, %v296
        %v347 = vpack.c.bf16 %v341, %v337
        %v348 = vpack.c.bf16 %v343, %v339
        %v353 = vunpack.c.l.b16 %v345
        %v354 = vunpack.c.l.b16 %v346
        %v355 = vunpack.c.l.b16 %v347
        %v356 = vunpack.c.l.b16 %v348
        %v357 = vunpack.c.h.b16 %v345
        %v358 = vunpack.c.h.b16 %v346
        %v359 = vunpack.c.h.b16 %v347
        %v360 = vunpack.c.h.b16 %v348
        %v361 = vpack.c.b16 %v354, %v353
        %v362 = vpack.c.b16 %v356, %v355
        %v363 = vpack.c.b16 %v358, %v357
        %v364 = vpack.c.b16 %v360, %v359
        %369 = vst [vmem:[%s198] sm:$0xff] %v361
        %370 = vst [vmem:[%s198 + $0x8] sm:$0xff] %v362
        %371 = vst [vmem:[%s198 + $0x10] sm:$0xff] %v363
        %372 = vst [vmem:[%s198 + $0x18] sm:$0xff] %v364
        %s373 = sand.u32 %s94, 1
        %s374 = scalar_lea.sflag [#allocation4], %s373
        %s375 = sand.u32 %s94, 1
        %s376 = smul.addr %s375, 32
        %s377 = scalar_lea.vmem [#allocation7], %s376
        // Predicated region
        $region37: #{tpu_custom_call.1} parent=27 // pred_check
          %p378 = pneg %p104
        $region38: #{tpu_custom_call.1} parent=27 // pred_check_branch
          %380 = sbr.rel (%p378) target = $region40
        $region39: #{tpu_custom_call.1} parent=27 // pred_region
          %s381 = smul.u32 2, %s24
          %s382 = smul.u32 4, %s25
          %s384 = ssub.s32 512, 512
          %385 = vsyncadd %s374, %s384
          %s386 = smul.addr %s381, 12
          %s387 = sadd.s32 %s382, %s386
          %s388 = smul.addr %s387, 64
          %s389 = scalar_lea.hbm %s2, %s388
          %s390 = sshll.u32 %s377, 4
          %s391 = int_to_ptr.vmem [resolvable:$true] %s390
          %396 = dma.vmem_to_hbm [thread:$0]  %s391, 512, %s389, %s374, 256, 768, 16
        $region40: #{tpu_custom_call.1} parent=27 // pred_fallthru
          _
      $region28: #{tpu_custom_call.1} parent=5 // pred_fallthru
        _
      %p397 = scmp.le.s32.totalorder 2, %s15
      // Predicated region
      $region41: #{tpu_custom_call.1} parent=5 // pred_check
        %p398 = pneg %p397
      $region42: #{tpu_custom_call.1} parent=5 // pred_check_branch
        %400 = sbr.rel (%p398) target = $region44
      $region43: #{tpu_custom_call.1} parent=5 // pred_region
        %s401 = ssub.s32 %s15, 2
        // Predicated region
        $region45: #{tpu_custom_call.1} parent=43 // pred_check
          %p402 = pneg %p110
        $region46: #{tpu_custom_call.1} parent=43 // pred_check_branch
          %404 = sbr.rel (%p402) target = $region48
        $region47: #{tpu_custom_call.1} parent=43 // pred_region
          %s405 = sand.u32 %s95, 1
          %s406 = scalar_lea.sflag [#allocation4], %s405
          %s407 = sand.u32 %s95, 1
          %s408 = smul.addr %s407, 32
          %s409 = scalar_lea.vmem [#allocation7], %s408
          %410 = dma.done %s406, 512
        $region48: #{tpu_custom_call.1} parent=43 // pred_fallthru
          _
      $region44: #{tpu_custom_call.1} parent=5 // pred_fallthru
        _
    $region6: #{tpu_custom_call.1} parent=1 // loop_footer
      %s19 = sadd.s32 1, %s15
    $region7: #{tpu_custom_call.1} parent=1 // loop_footer_branch
      %14 = sbr.rel target = $region3
    $region8: #{tpu_custom_call.1} parent=1 // loop_exit
      _
    %411 = vsyncpa [#allocation3], 1
    %s412 = scalar_lea.sflag [#allocation3], 1
    %413 = vsyncpa %s412, 1
    %414 = vsyncpa [#allocation6], 1
    %s415 = scalar_lea.sflag [#allocation6], 1
    %416 = vsyncpa %s415, 1
    %417 = vsyncpa [#allocation4], 1
    %s418 = scalar_lea.sflag [#allocation4], 1
    %419 = vsyncpa %s418, 1

</llo_original>
